<compile_context>
chip_gen: v7x
topology: tpu7x:2x2x1
jax: 0.10.0
libtpu: 0.0.40
codegen_flags: <defaults>
</compile_context>

<pallas_src>
import functools

import jax
import jax.numpy as jnp
from jax.experimental import pallas as pl
from jax.experimental.pallas import tpu as pltpu


def _cw_margin_kernel(targets_ref, logits_ref, out_ref, *, margin):
    """Per-sample clamped CW margin for one batch tile.

    targets_ref: [TB, 1] int32, logits_ref: [TB, C], out_ref: [TB, 1] f32.
    """
    logits = logits_ref[...].astype(jnp.float32)            # [TB, C]
    targets = targets_ref[...]                               # [TB, 1] int32
    tb, c = logits.shape

    # Boolean one-hot mask via broadcasted iota compare (VPU only, no gather).
    cls_ids = jax.lax.broadcasted_iota(jnp.int32, (tb, c), 1)
    mask = cls_ids == targets                                 # [TB, C] bool

    # self_loss: logit of the target class.
    self_loss = jnp.sum(jnp.where(mask, logits, 0.0), axis=1, keepdims=True)

    # other_loss: max over non-target logits; target slot is exactly -1000.0
    # to match (1 - onehot) * logits - onehot * 1000 bit-for-bit.
    other_loss = jnp.max(jnp.where(mask, jnp.float32(-1000.0), logits),
                         axis=1, keepdims=True)

    out_ref[...] = jnp.maximum(self_loss - other_loss + jnp.float32(margin), 0.0)


def _vmem_capacity_bytes():
    try:
        return int(pltpu.get_tpu_info().vmem_capacity_bytes)
    except Exception:
        return 128 * 1024 * 1024  # conservative default (v5e/v6e)


def _pick_tile_rows(batch, num_classes, logits_itemsize, vmem_bytes):
    """Largest batch tile whose double-buffered footprint fits ~1/4 of VMEM."""
    budget = vmem_bytes // 4
    # Per-row VMEM bytes, double-buffered:
    #   logits tile:   C * itemsize
    #   targets tile:  padded to 128 lanes of int32
    #   output tile:   padded to 128 lanes of f32
    per_row = 2 * (num_classes * max(logits_itemsize, 1) + 128 * 4 + 128 * 4)
    tb = max(budget // per_row, 8)
    tb = min(tb, 4096)
    tb = (tb // 8) * 8                       # sublane-aligned
    b_pad = ((batch + 7) // 8) * 8
    return max(8, min(tb, b_pad))


def cw_loss(logits, targets, num_classes, margin=50.0, reduce=True,
            use_pallas=None):
    """logits: [B, num_classes] float, targets: [B] int -> scalar loss."""
    B, C = logits.shape
    assert C == num_classes

    # Tiny problems: a single pallas_call launch costs more than the fused
    # XLA version; auto-dispatch to pure JAX unless the caller forces Pallas.
    if use_pallas is None:
        use_pallas = (B * C) >= (1 << 16)
    if not use_pallas:
        return cw_loss_ref(logits, targets, num_classes, margin, reduce)

    targets_2d = targets.astype(jnp.int32).reshape(B, 1)
    itemsize = jnp.dtype(logits.dtype).itemsize

    vmem_bytes = _vmem_capacity_bytes()
    TB = _pick_tile_rows(B, C, itemsize, vmem_bytes)
    grid = (pl.cdiv(B, TB),)

    vmem_limit = int(max(32 * 1024 * 1024, min(vmem_bytes // 2, 96 * 1024 * 1024)))

    kernel = functools.partial(_cw_margin_kernel, margin=float(margin))

    per_sample = pl.pallas_call(
        kernel,
        out_shape=jax.ShapeDtypeStruct((B, 1), jnp.float32),
        grid=grid,
        in_specs=[
            pl.BlockSpec((TB, 1), lambda i: (i, 0)),   # targets (int32)
            pl.BlockSpec((TB, C), lambda i: (i, 0)),   # logits tile
        ],
        out_specs=pl.BlockSpec((TB, 1), lambda i: (i, 0)),
        compiler_params=pltpu.CompilerParams(
            dimension_semantics=("parallel",),
            vmem_limit_bytes=vmem_limit,
        ),
        cost_estimate=pl.CostEstimate(
            flops=3 * B * C,
            transcendentals=0,
            bytes_accessed=B * C * itemsize + B * 4 + B * 4,
        ),
    )(targets_2d, logits)

    # Finalize with the GLOBAL batch size (not the tile size).
    loss = -jnp.sum(per_sample)
    if reduce:
        loss = loss / jnp.float32(B)
    return loss


def cw_loss_ref(logits, targets, num_classes, margin=50.0, reduce=True):
    onehot = jax.nn.one_hot(targets, num_classes, dtype=jnp.float32)
    logits = logits.astype(jnp.float32)
    self_loss = jnp.sum(onehot * logits, axis=1)
    other_loss = jnp.max((1.0 - onehot) * logits - onehot * 1000.0, axis=1)
    loss = -jnp.sum(jnp.maximum(self_loss - other_loss + margin, 0.0))
    if reduce:
        loss = loss / logits.shape[0]
    return loss


if __name__ == "__main__":
    key = jax.random.PRNGKey(0)
    k1, k2 = jax.random.split(key)

    B, num_classes = 8, 32
    logits = jax.random.normal(k1, (B, num_classes), dtype=jnp.float32) * 5.0
    targets = jax.random.randint(k2, (B,), 0, num_classes, dtype=jnp.int32)

    # Force the Pallas path so the kernel itself is exercised at demo size.
    out = cw_loss(logits, targets, num_classes, margin=50.0, reduce=True,
                  use_pallas=True)
    out = jax.block_until_ready(out)

    ref = cw_loss_ref(logits, targets, num_classes, margin=50.0, reduce=True)
    assert jnp.allclose(out, ref, rtol=1e-5, atol=1e-5), (out, ref)

    print("KERNEL_OK")
</pallas_src>

<mosaic_0001>
module attributes {stable_mosaic.version = 11 : i64} {
  func.func @_cw_margin_kernel(%arg0: i32, %arg1: memref<8x1xi32, #tpu.memory_space<vmem>>, %arg2: memref<8x32xf32, #tpu.memory_space<vmem>>, %arg3: memref<8x1xf32, #tpu.memory_space<vmem>>) attributes {dimension_semantics = [#tpu.dimension_semantics<parallel>], iteration_bounds = array<i64: 1>, scalar_prefetch = 0 : i64, scratch_operands = 0 : i64, tpu.core_type = #tpu.core_type<tc>, window_params = [{transform_indices = @transform_0, window_bounds = array<i64: 8, 1>}, {transform_indices = @transform_1, window_bounds = array<i64: 8, 32>}, {transform_indices = @transform_2, window_bounds = array<i64: 8, 1>}]} {
    %c0 = arith.constant 0 : index
    %c0_0 = arith.constant 0 : index
    %0 = vector.load %arg2[%c0, %c0_0] : memref<8x32xf32, #tpu.memory_space<vmem>>, vector<8x32xf32>
    %c0_1 = arith.constant 0 : index
    %c0_2 = arith.constant 0 : index
    %1 = vector.load %arg1[%c0_1, %c0_2] : memref<8x1xi32, #tpu.memory_space<vmem>>, vector<8x1xi32>
    %2 = tpu.iota {dimensions = array<i32: 1>} : vector<8x32xi32>
    %3 = vector.broadcast %1 : vector<8x1xi32> to vector<8x32xi32>
    %4 = arith.cmpi eq, %2, %3 : vector<8x32xi32>
    %cst = arith.constant 0.000000e+00 : f32
    %5 = vector.broadcast %cst : f32 to vector<8x32xf32>
    %6 = arith.select %4, %0, %5 : vector<8x32xi1>, vector<8x32xf32>
    %cst_3 = arith.constant dense<0.000000e+00> : vector<8xf32>
    %7 = vector.multi_reduction <add>, %6, %cst_3 [1] : vector<8x32xf32> to vector<8xf32>
    %8 = vector.shape_cast %7 : vector<8xf32> to vector<8x1xf32>
    %cst_4 = arith.constant -1.000000e+03 : f32
    %9 = vector.broadcast %cst_4 : f32 to vector<8x32xf32>
    %10 = arith.select %4, %9, %0 : vector<8x32xi1>, vector<8x32xf32>
    %cst_5 = arith.constant dense<0xFF800000> : vector<8xf32>
    %11 = vector.multi_reduction <maximumf>, %10, %cst_5 [1] : vector<8x32xf32> to vector<8xf32>
    %12 = vector.shape_cast %11 : vector<8xf32> to vector<8x1xf32>
    %13 = arith.subf %8, %12 : vector<8x1xf32>
    %cst_6 = arith.constant 5.000000e+01 : f32
    %14 = vector.broadcast %cst_6 : f32 to vector<8x1xf32>
    %15 = arith.addf %13, %14 : vector<8x1xf32>
    %cst_7 = arith.constant 0.000000e+00 : f32
    %16 = vector.broadcast %cst_7 : f32 to vector<8x1xf32>
    %17 = arith.maximumf %15, %16 : vector<8x1xf32>
    %c0_8 = arith.constant 0 : index
    %c0_9 = arith.constant 0 : index
    %18 = vector.load %arg3[%c0_8, %c0_9] : memref<8x1xf32, #tpu.memory_space<vmem>>, vector<8x1xf32>
    tpu.vector_store %arg3[%c0_8, %c0_9], %17 {strides = array<i32>} : memref<8x1xf32, #tpu.memory_space<vmem>>, vector<8x1xf32>,
    return
  }
  func.func @transform_0(%arg0: i32) -> (i32, i32) {
    %c0_i32 = arith.constant 0 : i32
    %c0_i32_0 = arith.constant 0 : i32
    return %arg0, %c0_i32 : i32, i32
  }
  func.func @transform_1(%arg0: i32) -> (i32, i32) {
    %c0_i32 = arith.constant 0 : i32
    %c0_i32_0 = arith.constant 0 : i32
    return %arg0, %c0_i32 : i32, i32
  }
  func.func @transform_2(%arg0: i32) -> (i32, i32) {
    %c0_i32 = arith.constant 0 : i32
    %c0_i32_0 = arith.constant 0 : i32
    return %arg0, %c0_i32 : i32, i32
  }
}

</mosaic_0001>

<llo_original>
// kernel: tpu_custom_call.1
$region0: #{tpu_custom_call.1}
  #allocation0 [shape = 'u32[]', space=smem, size = 0x4, offset = 0x4, fixed_abs, tag = 'smem constant byte address 0x4 - core index']
  #allocation1 [shape = 'u32[144,128]{1,0:T(1,128)}', space=vmem, size = 0x12000, scoped, tag = 'internal scratch']
  %s0 = inlined_call_operand.hbm [shape: s32[8,1], index: 0, kind: input, shape index: {}]
  %s1 = inlined_call_operand.hbm [shape: f32[8,32], index: 1, kind: input, shape index: {}]
  %s2 = inlined_call_operand.hbm [shape: f32[8,1], index: 2, kind: output, shape index: {}]
  %s3 = sld [smem:[#allocation0]]
  $region26: #{tpu_custom_call.1} parent=0
    _
  %s5 = ssub.s32 1, %s3
  %s6 = scalar_select 0, %s5, %s3
  $region1: #{tpu_custom_call.1} parent=0
    #allocation2 [shape = 'u8[4096]{0}', space=vmem, size = 0x1000, scoped, tag = 'input window, operand 0, single buffered']
    #allocation3 [shape = 's32[1]{0}', space=sflag, size = 0x4, scoped, tag = 'scoped memory for tpu_custom_call.1']
    #allocation4 [shape = 's32[1]{0}', space=sflag, size = 0x4, scoped, tag = 'scoped memory for tpu_custom_call.1']
    #allocation5 [shape = 'u8[4096]{0}', space=vmem, size = 0x1000, scoped, tag = 'input window, operand 1, single buffered']
    #allocation6 [shape = 's32[1]{0}', space=sflag, size = 0x4, scoped, tag = 'scoped memory for tpu_custom_call.1']
    #allocation7 [shape = 'u8[4096]{0}', space=vmem, size = 0x1000, scoped, tag = 'output window, operand 0, single buffered']
    %7 = vsyncpa [#allocation3], 0
    %8 = vsyncpa [#allocation6], 0
    %9 = vsyncpa [#allocation4], 0
    // Predicated region
    $region2: #{tpu_custom_call.1} parent=1 // pred_check
      _
    $region3: #{tpu_custom_call.1} parent=1 // pred_check_branch
      %11 = sbr.rel (0) target = $region5
    $region4: #{tpu_custom_call.1} parent=1 // pred_region
      %s13 = ssub.s32 128, 128
      %14 = vsyncadd [#allocation3], %s13
      %s16 = sshll.u32 [#allocation2], 4
      %s17 = int_to_ptr.vmem [resolvable:$true] %s16
      %19 = dma.hbm_to_vmem [thread:$0]  %s0, 128, %s17, [#allocation3]
    $region5: #{tpu_custom_call.1} parent=1 // pred_fallthru
      _
    // Predicated region
    $region6: #{tpu_custom_call.1} parent=1 // pred_check
      _
    $region7: #{tpu_custom_call.1} parent=1 // pred_check_branch
      %21 = sbr.rel (0) target = $region9
    $region8: #{tpu_custom_call.1} parent=1 // pred_region
      %s23 = ssub.s32 128, 128
      %24 = vsyncadd [#allocation6], %s23
      %s26 = sshll.u32 [#allocation5], 4
      %s27 = int_to_ptr.vmem [resolvable:$true] %s26
      %29 = dma.hbm_to_vmem [thread:$0]  %s1, 128, %s27, [#allocation6]
    $region9: #{tpu_custom_call.1} parent=1 // pred_fallthru
      _
    // Predicated region
    $region10: #{tpu_custom_call.1} parent=1 // pred_check
      _
    $region11: #{tpu_custom_call.1} parent=1 // pred_check_branch
      %31 = sbr.rel (0) target = $region13
    $region12: #{tpu_custom_call.1} parent=1 // pred_region
      %32 = dma.done [#allocation3], 128
    $region13: #{tpu_custom_call.1} parent=1 // pred_fallthru
      _
    // Predicated region
    $region14: #{tpu_custom_call.1} parent=1 // pred_check
      _
    $region15: #{tpu_custom_call.1} parent=1 // pred_check_branch
      %34 = sbr.rel (0) target = $region17
    $region16: #{tpu_custom_call.1} parent=1 // pred_region
      %35 = dma.done [#allocation6], 128
    $region17: #{tpu_custom_call.1} parent=1 // pred_fallthru
      _
    %v36 = vld [vmem:[#allocation5] sm:$0xff]
    %v37 = vld [vmem:[#allocation2] sm:$0xff]
    %v38 = vlaneseq
    %v39 = vand.u32 %v38, 127
    %40 = vset.pattern.permute.xlu0 0
    %41 = vperm.xlu0 %40, %v37
    %v42 = vpop.permute.xlu0 %41
    %vm43 = vcmp.eq.s32.totalorder %v39, %v42
    %v44 = vsel %vm43, %v36, 0.0
    %vm45 = vcmask 261120
    %v46 = vsel %vm45, %v44, 0.0
    %47 = vadd.xlane.f32.xlu0 %v46
    %v48 = vpop.xlane.xlu0 %47
    %v49 = vsel %vm43, -1000.0, %v36
    %v50 = vsel %vm45, %v49, -inf
    %51 = vmax.xlane.f32.xlu0 %v50
    %v52 = vpop.xlane.xlu0 %51
    %v53 = vsub.f32 %v48, %v52
    %v54 = vadd.f32 %v53, 50.0
    %v55 = vmax.f32 %v54, 0.0
    %vm56 = vcmask 7168
    %57 = vst.msk [vmem:[#allocation7] sm:$0xff] %vm56, %v55
    // Predicated region
    $region18: #{tpu_custom_call.1} parent=1 // pred_check
      _
    $region19: #{tpu_custom_call.1} parent=1 // pred_check_branch
      %59 = sbr.rel (0) target = $region21
    $region20: #{tpu_custom_call.1} parent=1 // pred_region
      %s61 = ssub.s32 128, 128
      %62 = vsyncadd [#allocation4], %s61
      %s64 = sshll.u32 [#allocation7], 4
      %s65 = int_to_ptr.vmem [resolvable:$true] %s64
      %67 = dma.vmem_to_hbm [thread:$0]  %s65, 128, %s2, [#allocation4]
    $region21: #{tpu_custom_call.1} parent=1 // pred_fallthru
      _
    // Predicated region
    $region22: #{tpu_custom_call.1} parent=1 // pred_check
      _
    $region23: #{tpu_custom_call.1} parent=1 // pred_check_branch
      %69 = sbr.rel (0) target = $region25
    $region24: #{tpu_custom_call.1} parent=1 // pred_region
      %70 = dma.done [#allocation4], 128
    $region25: #{tpu_custom_call.1} parent=1 // pred_fallthru
      _
    %71 = vsyncpa [#allocation3], 1
    %72 = vsyncpa [#allocation6], 1
    %73 = vsyncpa [#allocation4], 1

</llo_original>
